<compile_context>
chip_gen: v5e
topology: v5e:2x2
jax: 0.10.0
libtpu: 0.0.40
codegen_flags: <defaults>
</compile_context>

<pallas_src>
import functools

import jax
import jax.numpy as jnp
from jax.experimental import pallas as pl
from jax.experimental.pallas import tpu as pltpu

# Small synthetic hyperparameters (stand-ins for opt.input_layer etc.)
INPUT_DIM = 256    # opt.input_layer
HIDDEN_DIM = 128   # opt.hidden_layer
LATENT_DIM = 64    # opt.latent_layer
BATCH = 16         # whole batch handled in one kernel invocation


def _mm(a, w, use_bf16):
    """MXU matmul with f32 accumulation; optionally bf16 inputs (v6e/v7x fast path)."""
    if use_bf16:
        a = a.astype(jnp.bfloat16)
        w = w.astype(jnp.bfloat16)   # no-op if weights were pre-cast in the wrapper
    return jnp.dot(a, w, preferred_element_type=jnp.float32)


def _vae_kernel(x_ref, eps_ref,
                w1_ref, b1_ref,
                w2mu_ref, b2mu_ref, w2lv_ref, b2lv_ref,
                w3_ref, b3_ref, w4_ref, b4_ref,
                recon_ref, h_ref, *, use_bf16):
    x = x_ref[...]                                            # (B, INPUT_DIM) f32

    # ---- encoder: Linear -> ReLU -> Linear (head split into mu / logvar dots) ----
    h1 = _mm(x, w1_ref[...], use_bf16) + b1_ref[...]
    h1 = jnp.maximum(h1, 0.0)                                 # ReLU in f32 (VPU)
    mu = _mm(h1, w2mu_ref[...], use_bf16) + b2mu_ref[...]     # (B, LATENT)
    logvar = _mm(h1, w2lv_ref[...], use_bf16) + b2lv_ref[...] # (B, LATENT)

    # Lane-dense 128-wide encoder head output (split into mu/logvar in wrapper).
    h_ref[...] = jnp.concatenate([mu, logvar], axis=-1)

    # ---- reparameterize: z = mu + eps * exp(0.5 * logvar) (f32, EUP/VPU) ----
    z = mu + eps_ref[...] * jnp.exp(0.5 * logvar)

    # ---- decoder: Linear -> ReLU -> Linear -> Sigmoid ----
    d1 = _mm(z, w3_ref[...], use_bf16) + b3_ref[...]
    d1 = jnp.maximum(d1, 0.0)
    logits = _mm(d1, w4_ref[...], use_bf16) + b4_ref[...]
    recon_ref[...] = jax.nn.sigmoid(logits)


@functools.partial(jax.jit, static_argnames=("use_bf16",))
def scgen_vae_forward(x, eps, params, *, use_bf16=True):
    """x: (B, INPUT_DIM) f32; eps: (B, LATENT_DIM) f32."""
    w1, b1, w2, b2, w3, b3, w4, b4 = params
    B = x.shape[0]
    L = LATENT_DIM

    # Optionally pre-cast weights to bf16 (halves weight bytes; MXU fast path).
    wd = jnp.bfloat16 if use_bf16 else jnp.float32
    w1c = w1.astype(wd)
    w3c = w3.astype(wd)
    w4c = w4.astype(wd)
    # Split the encoder head weights so mu/logvar come from two half-width dots
    # (no in-kernel lane slicing of a 128-wide result).
    w2mu = w2[:, :L].astype(wd)
    w2lv = w2[:, L:].astype(wd)

    # Biases as (1, N) rows (f32) so they broadcast cleanly in VMEM.
    b1r = b1.reshape(1, -1)
    b2mu = b2[:L].reshape(1, -1)
    b2lv = b2[L:].reshape(1, -1)
    b3r = b3.reshape(1, -1)
    b4r = b4.reshape(1, -1)

    def full(shape):
        # Single-step grid: every array is one full-extent block resident in VMEM.
        return pl.BlockSpec(shape, lambda i: (0, 0))

    out_shapes = (
        jax.ShapeDtypeStruct((B, INPUT_DIM), jnp.float32),   # reconstruction
        jax.ShapeDtypeStruct((B, 2 * L), jnp.float32),       # [mu | logvar] head
    )

    recon, h = pl.pallas_call(
        functools.partial(_vae_kernel, use_bf16=use_bf16),
        out_shape=out_shapes,
        grid_spec=pltpu.PrefetchScalarGridSpec(
            num_scalar_prefetch=0,
            grid=(1,),                                        # one step: no pipeline overhead
            in_specs=[
                full((B, INPUT_DIM)),                         # x
                full((B, L)),                                 # eps
                full((INPUT_DIM, HIDDEN_DIM)),                # w1
                full((1, HIDDEN_DIM)),                        # b1
                full((HIDDEN_DIM, L)),                        # w2_mu
                full((1, L)),                                 # b2_mu
                full((HIDDEN_DIM, L)),                        # w2_logvar
                full((1, L)),                                 # b2_logvar
                full((L, HIDDEN_DIM)),                        # w3
                full((1, HIDDEN_DIM)),                        # b3
                full((HIDDEN_DIM, INPUT_DIM)),                # w4
                full((1, INPUT_DIM)),                         # b4
            ],
            out_specs=[
                full((B, INPUT_DIM)),                         # recon (lane-dense, 256 wide)
                full((B, 2 * L)),                             # encoder head (lane-dense, 128 wide)
            ],
        ),
        compiler_params=pltpu.CompilerParams(
            dimension_semantics=("arbitrary",)),
    )(x, eps, w1c, b1r, w2mu, b2mu, w2lv, b2lv, w3c, b3r, w4c, b4r)

    mu = h[:, :L]
    logvar = h[:, L:]
    return recon, mu, logvar


def init_params(key):
    """Deterministic PyTorch-style (uniform +-1/sqrt(fan_in)) init.

    Weights are stored as (in_features, out_features) = W^T.
    """
    def linear(k, fan_in, fan_out):
        kw, kb = jax.random.split(k)
        bound = 1.0 / jnp.sqrt(fan_in)
        w = jax.random.uniform(kw, (fan_in, fan_out), jnp.float32, -bound, bound)
        b = jax.random.uniform(kb, (fan_out,), jnp.float32, -bound, bound)
        return w, b

    k1, k2, k3, k4 = jax.random.split(key, 4)
    w1, b1 = linear(k1, INPUT_DIM, HIDDEN_DIM)
    w2, b2 = linear(k2, HIDDEN_DIM, 2 * LATENT_DIM)
    w3, b3 = linear(k3, LATENT_DIM, HIDDEN_DIM)
    w4, b4 = linear(k4, HIDDEN_DIM, INPUT_DIM)
    return (w1, b1, w2, b2, w3, b3, w4, b4)


def reference_forward(x, eps, params):
    w1, b1, w2, b2, w3, b3, w4, b4 = params
    h = jnp.maximum(x @ w1 + b1, 0.0) @ w2 + b2
    mu, logvar = h[:, :LATENT_DIM], h[:, LATENT_DIM:]
    z = mu + eps * jnp.exp(0.5 * logvar)
    recon = jax.nn.sigmoid(jnp.maximum(z @ w3 + b3, 0.0) @ w4 + b4)
    return recon, mu, logvar


if __name__ == "__main__":
    key = jax.random.PRNGKey(0)
    kp, kx, ke = jax.random.split(key, 3)

    params = init_params(kp)
    x = jax.random.normal(kx, (BATCH, INPUT_DIM), jnp.float32)
    # torch.randn_like(std) equivalent, made deterministic here.
    # TODO(synk): in-kernel pltpu PRNG noise is possible but not bitwise-reproducible vs jax.random.
    eps = jax.random.normal(ke, (BATCH, LATENT_DIM), jnp.float32)

    r_ref, m_ref, lv_ref = reference_forward(x, eps, params)

    # ---- full-f32 MXU path: tight numerical check ----
    recon, mu, logvar = scgen_vae_forward(x, eps, params, use_bf16=False)
    jax.block_until_ready((recon, mu, logvar))
    assert recon.shape == (BATCH, INPUT_DIM)
    assert mu.shape == (BATCH, LATENT_DIM)
    assert logvar.shape == (BATCH, LATENT_DIM)
    assert jnp.allclose(recon, r_ref, atol=1e-5, rtol=1e-5)
    assert jnp.allclose(mu, m_ref, atol=1e-5, rtol=1e-5)
    assert jnp.allclose(logvar, lv_ref, atol=1e-5, rtol=1e-5)

    # ---- bf16-input / f32-accumulate MXU path (default; v6e/v7x fast path) ----
    recon_b, mu_b, logvar_b = scgen_vae_forward(x, eps, params, use_bf16=True)
    jax.block_until_ready((recon_b, mu_b, logvar_b))
    assert jnp.allclose(recon_b, r_ref, atol=5e-2)
    assert jnp.allclose(mu_b, m_ref, atol=5e-2)
    assert jnp.allclose(logvar_b, lv_ref, atol=5e-2)

    print("KERNEL_OK")
</pallas_src>

<mosaic_0001>
module attributes {stable_mosaic.version = 11 : i64} {
  func.func @_vae_kernel(%arg0: i32, %arg1: memref<16x256xf32, #tpu.memory_space<vmem>>, %arg2: memref<16x64xf32, #tpu.memory_space<vmem>>, %arg3: memref<256x128xf32, #tpu.memory_space<vmem>>, %arg4: memref<1x128xf32, #tpu.memory_space<vmem>>, %arg5: memref<128x64xf32, #tpu.memory_space<vmem>>, %arg6: memref<1x64xf32, #tpu.memory_space<vmem>>, %arg7: memref<128x64xf32, #tpu.memory_space<vmem>>, %arg8: memref<1x64xf32, #tpu.memory_space<vmem>>, %arg9: memref<64x128xf32, #tpu.memory_space<vmem>>, %arg10: memref<1x128xf32, #tpu.memory_space<vmem>>, %arg11: memref<128x256xf32, #tpu.memory_space<vmem>>, %arg12: memref<1x256xf32, #tpu.memory_space<vmem>>, %arg13: memref<16x256xf32, #tpu.memory_space<vmem>>, %arg14: memref<16x128xf32, #tpu.memory_space<vmem>>) attributes {dimension_semantics = [#tpu.dimension_semantics<arbitrary>], iteration_bounds = array<i64: 1>, scalar_prefetch = 0 : i64, scratch_operands = 0 : i64, tpu.core_type = #tpu.core_type<tc>, window_params = [{pipeline_mode = #tpu.pipeline_mode<synchronous>, transform_indices = @transform_0, window_bounds = array<i64: 16, 256>}, {pipeline_mode = #tpu.pipeline_mode<synchronous>, transform_indices = @transform_1, window_bounds = array<i64: 16, 64>}, {pipeline_mode = #tpu.pipeline_mode<synchronous>, transform_indices = @transform_2, window_bounds = array<i64: 256, 128>}, {pipeline_mode = #tpu.pipeline_mode<synchronous>, transform_indices = @transform_3, window_bounds = array<i64: 1, 128>}, {pipeline_mode = #tpu.pipeline_mode<synchronous>, transform_indices = @transform_4, window_bounds = array<i64: 128, 64>}, {pipeline_mode = #tpu.pipeline_mode<synchronous>, transform_indices = @transform_5, window_bounds = array<i64: 1, 64>}, {pipeline_mode = #tpu.pipeline_mode<synchronous>, transform_indices = @transform_6, window_bounds = array<i64: 128, 64>}, {pipeline_mode = #tpu.pipeline_mode<synchronous>, transform_indices = @transform_7, window_bounds = array<i64: 1, 64>}, {pipeline_mode = #tpu.pipeline_mode<synchronous>, transform_indices = @transform_8, window_bounds = array<i64: 64, 128>}, {pipeline_mode = #tpu.pipeline_mode<synchronous>, transform_indices = @transform_9, window_bounds = array<i64: 1, 128>}, {pipeline_mode = #tpu.pipeline_mode<synchronous>, transform_indices = @transform_10, window_bounds = array<i64: 128, 256>}, {pipeline_mode = #tpu.pipeline_mode<synchronous>, transform_indices = @transform_11, window_bounds = array<i64: 1, 256>}, {pipeline_mode = #tpu.pipeline_mode<synchronous>, transform_indices = @transform_12, window_bounds = array<i64: 16, 256>}, {pipeline_mode = #tpu.pipeline_mode<synchronous>, transform_indices = @transform_13, window_bounds = array<i64: 16, 128>}]} {
    %c0 = arith.constant 0 : index
    %c0_0 = arith.constant 0 : index
    %0 = vector.load %arg1[%c0, %c0_0] : memref<16x256xf32, #tpu.memory_space<vmem>>, vector<16x256xf32>
    %c0_1 = arith.constant 0 : index
    %c0_2 = arith.constant 0 : index
    %1 = vector.load %arg3[%c0_1, %c0_2] : memref<256x128xf32, #tpu.memory_space<vmem>>, vector<256x128xf32>
    %cst = arith.constant dense<0.000000e+00> : vector<16x128xf32>
    %2 = tpu.matmul %0, %1, %cst {dimension_numbers = #tpu.dot_dimension_numbers<[1], [0], [0], [1], [0, 0, 1, 1], [], []>} : vector<16x256xf32>, vector<256x128xf32>, vector<16x128xf32> -> vector<16x128xf32>
    %c0_3 = arith.constant 0 : index
    %c0_4 = arith.constant 0 : index
    %3 = vector.load %arg4[%c0_3, %c0_4] : memref<1x128xf32, #tpu.memory_space<vmem>>, vector<1x128xf32>
    %4 = vector.broadcast %3 : vector<1x128xf32> to vector<16x128xf32>
    %5 = arith.addf %2, %4 : vector<16x128xf32>
    %cst_5 = arith.constant 0.000000e+00 : f32
    %6 = vector.broadcast %cst_5 : f32 to vector<16x128xf32>
    %7 = arith.maximumf %5, %6 : vector<16x128xf32>
    %c0_6 = arith.constant 0 : index
    %c0_7 = arith.constant 0 : index
    %8 = vector.load %arg5[%c0_6, %c0_7] : memref<128x64xf32, #tpu.memory_space<vmem>>, vector<128x64xf32>
    %cst_8 = arith.constant dense<0.000000e+00> : vector<16x64xf32>
    %9 = tpu.matmul %7, %8, %cst_8 {dimension_numbers = #tpu.dot_dimension_numbers<[1], [0], [0], [1], [0, 0, 1, 1], [], []>} : vector<16x128xf32>, vector<128x64xf32>, vector<16x64xf32> -> vector<16x64xf32>
    %c0_9 = arith.constant 0 : index
    %c0_10 = arith.constant 0 : index
    %10 = vector.load %arg6[%c0_9, %c0_10] : memref<1x64xf32, #tpu.memory_space<vmem>>, vector<1x64xf32>
    %11 = vector.broadcast %10 : vector<1x64xf32> to vector<16x64xf32>
    %12 = arith.addf %9, %11 : vector<16x64xf32>
    %c0_11 = arith.constant 0 : index
    %c0_12 = arith.constant 0 : index
    %13 = vector.load %arg7[%c0_11, %c0_12] : memref<128x64xf32, #tpu.memory_space<vmem>>, vector<128x64xf32>
    %cst_13 = arith.constant dense<0.000000e+00> : vector<16x64xf32>
    %14 = tpu.matmul %7, %13, %cst_13 {dimension_numbers = #tpu.dot_dimension_numbers<[1], [0], [0], [1], [0, 0, 1, 1], [], []>} : vector<16x128xf32>, vector<128x64xf32>, vector<16x64xf32> -> vector<16x64xf32>
    %c0_14 = arith.constant 0 : index
    %c0_15 = arith.constant 0 : index
    %15 = vector.load %arg8[%c0_14, %c0_15] : memref<1x64xf32, #tpu.memory_space<vmem>>, vector<1x64xf32>
    %16 = vector.broadcast %15 : vector<1x64xf32> to vector<16x64xf32>
    %17 = arith.addf %14, %16 : vector<16x64xf32>
    %18 = tpu.concatenate %12, %17 in 1 : vector<16x64xf32>, vector<16x64xf32> -> vector<16x128xf32>
    %c0_16 = arith.constant 0 : index
    %c0_17 = arith.constant 0 : index
    %19 = vector.load %arg14[%c0_16, %c0_17] : memref<16x128xf32, #tpu.memory_space<vmem>>, vector<16x128xf32>
    tpu.vector_store %arg14[%c0_16, %c0_17], %18 {strides = array<i32>} : memref<16x128xf32, #tpu.memory_space<vmem>>, vector<16x128xf32>,
    %c0_18 = arith.constant 0 : index
    %c0_19 = arith.constant 0 : index
    %20 = vector.load %arg2[%c0_18, %c0_19] : memref<16x64xf32, #tpu.memory_space<vmem>>, vector<16x64xf32>
    %cst_20 = arith.constant 5.000000e-01 : f32
    %21 = vector.broadcast %cst_20 : f32 to vector<16x64xf32>
    %22 = arith.mulf %21, %17 : vector<16x64xf32>
    %23 = math.exp %22 : vector<16x64xf32>
    %24 = arith.mulf %20, %23 : vector<16x64xf32>
    %25 = arith.addf %12, %24 : vector<16x64xf32>
    %c0_21 = arith.constant 0 : index
    %c0_22 = arith.constant 0 : index
    %26 = vector.load %arg9[%c0_21, %c0_22] : memref<64x128xf32, #tpu.memory_space<vmem>>, vector<64x128xf32>
    %cst_23 = arith.constant dense<0.000000e+00> : vector<16x128xf32>
    %27 = tpu.matmul %25, %26, %cst_23 {dimension_numbers = #tpu.dot_dimension_numbers<[1], [0], [0], [1], [0, 0, 1, 1], [], []>} : vector<16x64xf32>, vector<64x128xf32>, vector<16x128xf32> -> vector<16x128xf32>
    %c0_24 = arith.constant 0 : index
    %c0_25 = arith.constant 0 : index
    %28 = vector.load %arg10[%c0_24, %c0_25] : memref<1x128xf32, #tpu.memory_space<vmem>>, vector<1x128xf32>
    %29 = vector.broadcast %28 : vector<1x128xf32> to vector<16x128xf32>
    %30 = arith.addf %27, %29 : vector<16x128xf32>
    %cst_26 = arith.constant 0.000000e+00 : f32
    %31 = vector.broadcast %cst_26 : f32 to vector<16x128xf32>
    %32 = arith.maximumf %30, %31 : vector<16x128xf32>
    %c0_27 = arith.constant 0 : index
    %c0_28 = arith.constant 0 : index
    %33 = vector.load %arg11[%c0_27, %c0_28] : memref<128x256xf32, #tpu.memory_space<vmem>>, vector<128x256xf32>
    %cst_29 = arith.constant dense<0.000000e+00> : vector<16x256xf32>
    %34 = tpu.matmul %32, %33, %cst_29 {dimension_numbers = #tpu.dot_dimension_numbers<[1], [0], [0], [1], [0, 0, 1, 1], [], []>} : vector<16x128xf32>, vector<128x256xf32>, vector<16x256xf32> -> vector<16x256xf32>
    %c0_30 = arith.constant 0 : index
    %c0_31 = arith.constant 0 : index
    %35 = vector.load %arg12[%c0_30, %c0_31] : memref<1x256xf32, #tpu.memory_space<vmem>>, vector<1x256xf32>
    %36 = vector.broadcast %35 : vector<1x256xf32> to vector<16x256xf32>
    %37 = arith.addf %34, %36 : vector<16x256xf32>
    %38 = arith.negf %37 : vector<16x256xf32>
    %39 = math.exp %38 : vector<16x256xf32>
    %cst_32 = arith.constant 1.000000e+00 : f32
    %40 = vector.broadcast %cst_32 : f32 to vector<16x256xf32>
    %41 = arith.addf %40, %39 : vector<16x256xf32>
    %42 = arith.divf %40, %41 : vector<16x256xf32>
    %c0_33 = arith.constant 0 : index
    %c0_34 = arith.constant 0 : index
    %43 = vector.load %arg13[%c0_33, %c0_34] : memref<16x256xf32, #tpu.memory_space<vmem>>, vector<16x256xf32>
    tpu.vector_store %arg13[%c0_33, %c0_34], %42 {strides = array<i32>} : memref<16x256xf32, #tpu.memory_space<vmem>>, vector<16x256xf32>,
    return
  }
  func.func @transform_0(%arg0: i32) -> (i32, i32) {
    %c0_i32 = arith.constant 0 : i32
    %c0_i32_0 = arith.constant 0 : i32
    %c0_i32_1 = arith.constant 0 : i32
    return %c0_i32, %c0_i32_0 : i32, i32
  }
  func.func @transform_1(%arg0: i32) -> (i32, i32) {
    %c0_i32 = arith.constant 0 : i32
    %c0_i32_0 = arith.constant 0 : i32
    %c0_i32_1 = arith.constant 0 : i32
    return %c0_i32, %c0_i32_0 : i32, i32
  }
  func.func @transform_2(%arg0: i32) -> (i32, i32) {
    %c0_i32 = arith.constant 0 : i32
    %c0_i32_0 = arith.constant 0 : i32
    %c0_i32_1 = arith.constant 0 : i32
    return %c0_i32, %c0_i32_0 : i32, i32
  }
  func.func @transform_3(%arg0: i32) -> (i32, i32) {
    %c0_i32 = arith.constant 0 : i32
    %c0_i32_0 = arith.constant 0 : i32
    %c0_i32_1 = arith.constant 0 : i32
    return %c0_i32, %c0_i32_0 : i32, i32
  }
  func.func @transform_4(%arg0: i32) -> (i32, i32) {
    %c0_i32 = arith.constant 0 : i32
    %c0_i32_0 = arith.constant 0 : i32
    %c0_i32_1 = arith.constant 0 : i32
    return %c0_i32, %c0_i32_0 : i32, i32
  }
  func.func @transform_5(%arg0: i32) -> (i32, i32) {
    %c0_i32 = arith.constant 0 : i32
    %c0_i32_0 = arith.constant 0 : i32
    %c0_i32_1 = arith.constant 0 : i32
    return %c0_i32, %c0_i32_0 : i32, i32
  }
  func.func @transform_6(%arg0: i32) -> (i32, i32) {
    %c0_i32 = arith.constant 0 : i32
    %c0_i32_0 = arith.constant 0 : i32
    %c0_i32_1 = arith.constant 0 : i32
    return %c0_i32, %c0_i32_0 : i32, i32
  }
  func.func @transform_7(%arg0: i32) -> (i32, i32) {
    %c0_i32 = arith.constant 0 : i32
    %c0_i32_0 = arith.constant 0 : i32
    %c0_i32_1 = arith.constant 0 : i32
    return %c0_i32, %c0_i32_0 : i32, i32
  }
  func.func @transform_8(%arg0: i32) -> (i32, i32) {
    %c0_i32 = arith.constant 0 : i32
    %c0_i32_0 = arith.constant 0 : i32
    %c0_i32_1 = arith.constant 0 : i32
    return %c0_i32, %c0_i32_0 : i32, i32
  }
  func.func @transform_9(%arg0: i32) -> (i32, i32) {
    %c0_i32 = arith.constant 0 : i32
    %c0_i32_0 = arith.constant 0 : i32
    %c0_i32_1 = arith.constant 0 : i32
    return %c0_i32, %c0_i32_0 : i32, i32
  }
  func.func @transform_10(%arg0: i32) -> (i32, i32) {
    %c0_i32 = arith.constant 0 : i32
    %c0_i32_0 = arith.constant 0 : i32
    %c0_i32_1 = arith.constant 0 : i32
    return %c0_i32, %c0_i32_0 : i32, i32
  }
  func.func @transform_11(%arg0: i32) -> (i32, i32) {
    %c0_i32 = arith.constant 0 : i32
    %c0_i32_0 = arith.constant 0 : i32
    %c0_i32_1 = arith.constant 0 : i32
    return %c0_i32, %c0_i32_0 : i32, i32
  }
  func.func @transform_12(%arg0: i32) -> (i32, i32) {
    %c0_i32 = arith.constant 0 : i32
    %c0_i32_0 = arith.constant 0 : i32
    %c0_i32_1 = arith.constant 0 : i32
    return %c0_i32, %c0_i32_0 : i32, i32
  }
  func.func @transform_13(%arg0: i32) -> (i32, i32) {
    %c0_i32 = arith.constant 0 : i32
    %c0_i32_0 = arith.constant 0 : i32
    %c0_i32_1 = arith.constant 0 : i32
    return %c0_i32, %c0_i32_0 : i32, i32
  }
}

</mosaic_0001>

<llo_original>
// kernel: scgen_vae_forward.1
$region0: #{scgen_vae_forward.1}
  #allocation0 [shape = 'u32[]', space=smem, size = 0x4, offset = 0x4, fixed_abs, tag = 'smem constant byte address 0x4 - core index']
  #allocation1 [shape = 'u32[72,128]{1,0:T(1,128)}', space=vmem, size = 0x9000, scoped, tag = 'internal scratch']
  %s0 = inlined_call_operand.hbm [shape: f32[16,256], index: 0, kind: input, shape index: {}]
  %s1 = inlined_call_operand.hbm [shape: f32[16,64], index: 1, kind: input, shape index: {}]
  %s2 = inlined_call_operand.vmem [shape: f32[256,128], index: 2, kind: input, shape index: {}]
  %s3 = inlined_call_operand.vmem [shape: f32[1,128], index: 3, kind: input, shape index: {}]
  %s4 = inlined_call_operand.vmem [shape: f32[128,64], index: 4, kind: input, shape index: {}]
  %s5 = inlined_call_operand.vmem [shape: f32[1,64], index: 5, kind: input, shape index: {}]
  %s6 = inlined_call_operand.vmem [shape: f32[128,64], index: 6, kind: input, shape index: {}]
  %s7 = inlined_call_operand.vmem [shape: f32[1,64], index: 7, kind: input, shape index: {}]
  %s8 = inlined_call_operand.hbm [shape: f32[64,128], index: 8, kind: input, shape index: {}]
  %s9 = inlined_call_operand.vmem [shape: f32[1,128], index: 9, kind: input, shape index: {}]
  %s10 = inlined_call_operand.vmem [shape: f32[128,256], index: 10, kind: input, shape index: {}]
  %s11 = inlined_call_operand.vmem [shape: f32[1,256], index: 11, kind: input, shape index: {}]
  %s12 = inlined_call_operand.hbm [shape: f32[16,256], index: 12, kind: output, shape index: {0}]
  %s13 = inlined_call_operand.vmem [shape: f32[16,128], index: 13, kind: output, shape index: {1}]
  %14 = xla_tuple %s12, %s13
  %s15 = sld [smem:[#allocation0]]
  $region78: #{scgen_vae_forward.1} parent=0
    _
  %s17 = ssub.s32 1, %s15
  %s18 = scalar_select 0, %s17, %s15
  $region1: #{scgen_vae_forward.1} parent=0
    #allocation2 [shape = 'u8[16384]{0}', space=vmem, size = 0x4000, scoped, tag = 'input window, operand 0, single buffered']
    #allocation3 [shape = 's32[1]{0}', space=sflag, size = 0x4, scoped, tag = 'scoped memory for scgen_vae_forward.1']
    #allocation4 [shape = 's32[1]{0}', space=sflag, size = 0x4, scoped, tag = 'scoped memory for scgen_vae_forward.1']
    #allocation5 [shape = 'u8[8192]{0}', space=vmem, size = 0x2000, scoped, tag = 'input window, operand 1, single buffered']
    #allocation6 [shape = 's32[1]{0}', space=sflag, size = 0x4, scoped, tag = 'scoped memory for scgen_vae_forward.1']
    #allocation7 [shape = 'u8[32768]{0}', space=vmem, size = 0x8000, scoped, tag = 'input window, operand 8, single buffered']
    #allocation8 [shape = 'u8[16384]{0}', space=vmem, size = 0x4000, scoped, tag = 'output window, operand 0, single buffered']
    %19 = vsyncpa [#allocation3], 0
    %20 = vsyncpa [#allocation6], 0
    %21 = vsyncpa [#allocation4], 0
    // Predicated region
    $region2: #{scgen_vae_forward.1} parent=1 // pred_check
      _
    $region3: #{scgen_vae_forward.1} parent=1 // pred_check_branch
      %23 = sbr.rel (0) target = $region5
    $region4: #{scgen_vae_forward.1} parent=1 // pred_region
      %25 = vsyncadd [#allocation3], 0
      %s26 = sshll.u32 %s0, 4
      %s27 = int_to_ptr.hbm [resolvable:$true] %s26
      %s28 = sshll.u32 [#allocation2], 4
      %s29 = int_to_ptr.vmem [resolvable:$true] %s28
      %34 = dma.hbm_to_vmem [thread:$0]  %s27, 512, %s29, [#allocation3], 256, 256, 16
    $region5: #{scgen_vae_forward.1} parent=1 // pred_fallthru
      _
    // Predicated region
    $region6: #{scgen_vae_forward.1} parent=1 // pred_check
      _
    $region7: #{scgen_vae_forward.1} parent=1 // pred_check_branch
      %36 = sbr.rel (0) target = $region9
    $region8: #{scgen_vae_forward.1} parent=1 // pred_region
      %38 = vsyncadd [#allocation6], 0
      %s39 = sshll.u32 %s1, 4
      %s40 = int_to_ptr.hbm [resolvable:$true] %s39
      %s41 = sshll.u32 [#allocation5], 4
      %s42 = int_to_ptr.vmem [resolvable:$true] %s41
      %47 = dma.hbm_to_vmem [thread:$0]  %s40, 256, %s42, [#allocation6], 128, 128, 8
    $region9: #{scgen_vae_forward.1} parent=1 // pred_fallthru
      _
    // Predicated region
    $region10: #{scgen_vae_forward.1} parent=1 // pred_check
      _
    $region11: #{scgen_vae_forward.1} parent=1 // pred_check_branch
      %49 = sbr.rel (0) target = $region13
    $region12: #{scgen_vae_forward.1} parent=1 // pred_region
      _
    $region13: #{scgen_vae_forward.1} parent=1 // pred_fallthru
      _
    // Predicated region
    $region14: #{scgen_vae_forward.1} parent=1 // pred_check
      _
    $region15: #{scgen_vae_forward.1} parent=1 // pred_check_branch
      %51 = sbr.rel (0) target = $region17
    $region16: #{scgen_vae_forward.1} parent=1 // pred_region
      _
    $region17: #{scgen_vae_forward.1} parent=1 // pred_fallthru
      _
    // Predicated region
    $region18: #{scgen_vae_forward.1} parent=1 // pred_check
      _
    $region19: #{scgen_vae_forward.1} parent=1 // pred_check_branch
      %53 = sbr.rel (0) target = $region21
    $region20: #{scgen_vae_forward.1} parent=1 // pred_region
      _
    $region21: #{scgen_vae_forward.1} parent=1 // pred_fallthru
      _
    // Predicated region
    $region22: #{scgen_vae_forward.1} parent=1 // pred_check
      _
    $region23: #{scgen_vae_forward.1} parent=1 // pred_check_branch
      %55 = sbr.rel (0) target = $region25
    $region24: #{scgen_vae_forward.1} parent=1 // pred_region
      _
    $region25: #{scgen_vae_forward.1} parent=1 // pred_fallthru
      _
    // Predicated region
    $region26: #{scgen_vae_forward.1} parent=1 // pred_check
      _
    $region27: #{scgen_vae_forward.1} parent=1 // pred_check_branch
      %57 = sbr.rel (0) target = $region29
    $region28: #{scgen_vae_forward.1} parent=1 // pred_region
      _
    $region29: #{scgen_vae_forward.1} parent=1 // pred_fallthru
      _
    // Predicated region
    $region30: #{scgen_vae_forward.1} parent=1 // pred_check
      _
    $region31: #{scgen_vae_forward.1} parent=1 // pred_check_branch
      %59 = sbr.rel (0) target = $region33
    $region32: #{scgen_vae_forward.1} parent=1 // pred_region
      _
    $region33: #{scgen_vae_forward.1} parent=1 // pred_fallthru
      _
    // Predicated region
    $region34: #{scgen_vae_forward.1} parent=1 // pred_check
      _
    $region35: #{scgen_vae_forward.1} parent=1 // pred_check_branch
      %61 = sbr.rel (0) target = $region37
    $region36: #{scgen_vae_forward.1} parent=1 // pred_region
      %63 = vsyncadd [#allocation6], 0
      %s64 = sshll.u32 %s8, 4
      %s65 = int_to_ptr.hbm [resolvable:$true] %s64
      %s66 = sshll.u32 [#allocation7], 4
      %s67 = int_to_ptr.vmem [resolvable:$true] %s66
      %72 = dma.hbm_to_vmem [thread:$0]  %s65, 1024, %s67, [#allocation6], 128, 128, 8
    $region37: #{scgen_vae_forward.1} parent=1 // pred_fallthru
      _
    // Predicated region
    $region38: #{scgen_vae_forward.1} parent=1 // pred_check
      _
    $region39: #{scgen_vae_forward.1} parent=1 // pred_check_branch
      %74 = sbr.rel (0) target = $region41
    $region40: #{scgen_vae_forward.1} parent=1 // pred_region
      _
    $region41: #{scgen_vae_forward.1} parent=1 // pred_fallthru
      _
    // Predicated region
    $region42: #{scgen_vae_forward.1} parent=1 // pred_check
      _
    $region43: #{scgen_vae_forward.1} parent=1 // pred_check_branch
      %76 = sbr.rel (0) target = $region45
    $region44: #{scgen_vae_forward.1} parent=1 // pred_region
      _
    $region45: #{scgen_vae_forward.1} parent=1 // pred_fallthru
      _
    // Predicated region
    $region46: #{scgen_vae_forward.1} parent=1 // pred_check
      _
    $region47: #{scgen_vae_forward.1} parent=1 // pred_check_branch
      %78 = sbr.rel (0) target = $region49
    $region48: #{scgen_vae_forward.1} parent=1 // pred_region
      _
    $region49: #{scgen_vae_forward.1} parent=1 // pred_fallthru
      _
    // Predicated region
    $region50: #{scgen_vae_forward.1} parent=1 // pred_check
      _
    $region51: #{scgen_vae_forward.1} parent=1 // pred_check_branch
      %80 = sbr.rel (0) target = $region53
    $region52: #{scgen_vae_forward.1} parent=1 // pred_region
      %82 = dma.done [#allocation3], 512
    $region53: #{scgen_vae_forward.1} parent=1 // pred_fallthru
      _
    // Predicated region
    $region54: #{scgen_vae_forward.1} parent=1 // pred_check
      _
    $region55: #{scgen_vae_forward.1} parent=1 // pred_check_branch
      %84 = sbr.rel (0) target = $region57
    $region56: #{scgen_vae_forward.1} parent=1 // pred_region
      %86 = dma.done [#allocation6], 256
    $region57: #{scgen_vae_forward.1} parent=1 // pred_fallthru
      _
    // Predicated region
    $region58: #{scgen_vae_forward.1} parent=1 // pred_check
      _
    $region59: #{scgen_vae_forward.1} parent=1 // pred_check_branch
      %88 = sbr.rel (0) target = $region61
    $region60: #{scgen_vae_forward.1} parent=1 // pred_region
      %90 = dma.done [#allocation6], 1024
    $region61: #{scgen_vae_forward.1} parent=1 // pred_fallthru
      _
    %v91 = vld [vmem:[#allocation2] sm:$0xff]
    %v92 = vld [vmem:[#allocation2 + $0x8] sm:$0xff]
    %v93 = vld [vmem:[#allocation2 + $0x10] sm:$0xff]
    %v94 = vld [vmem:[#allocation2 + $0x18] sm:$0xff]
    %v95 = vld [vmem:[%s2] sm:$0xff]
    %v96 = vld [vmem:[%s2 + $0x8] sm:$0xff]
    %v97 = vld [vmem:[%s2 + $0x10] sm:$0xff]
    %v98 = vld [vmem:[%s2 + $0x18] sm:$0xff]
    %v99 = vld [vmem:[%s2 + $0x20] sm:$0xff]
    %v100 = vld [vmem:[%s2 + $0x28] sm:$0xff]
    %v101 = vld [vmem:[%s2 + $0x30] sm:$0xff]
    %v102 = vld [vmem:[%s2 + $0x38] sm:$0xff]
    %v103 = vld [vmem:[%s2 + $0x40] sm:$0xff]
    %v104 = vld [vmem:[%s2 + $0x48] sm:$0xff]
    %v105 = vld [vmem:[%s2 + $0x50] sm:$0xff]
    %v106 = vld [vmem:[%s2 + $0x58] sm:$0xff]
    %v107 = vld [vmem:[%s2 + $0x60] sm:$0xff]
    %v108 = vld [vmem:[%s2 + $0x68] sm:$0xff]
    %v109 = vld [vmem:[%s2 + $0x70] sm:$0xff]
    %v110 = vld [vmem:[%s2 + $0x78] sm:$0xff]
    %v111 = vld [vmem:[%s2 + $0x80] sm:$0xff]
    %v112 = vld [vmem:[%s2 + $0x88] sm:$0xff]
    %v113 = vld [vmem:[%s2 + $0x90] sm:$0xff]
    %v114 = vld [vmem:[%s2 + $0x98] sm:$0xff]
    %v115 = vld [vmem:[%s2 + $0xa0] sm:$0xff]
    %v116 = vld [vmem:[%s2 + $0xa8] sm:$0xff]
    %v117 = vld [vmem:[%s2 + $0xb0] sm:$0xff]
    %v118 = vld [vmem:[%s2 + $0xb8] sm:$0xff]
    %v119 = vld [vmem:[%s2 + $0xc0] sm:$0xff]
    %v120 = vld [vmem:[%s2 + $0xc8] sm:$0xff]
    %v121 = vld [vmem:[%s2 + $0xd0] sm:$0xff]
    %v122 = vld [vmem:[%s2 + $0xd8] sm:$0xff]
    %v123 = vld [vmem:[%s2 + $0xe0] sm:$0xff]
    %v124 = vld [vmem:[%s2 + $0xe8] sm:$0xff]
    %v125 = vld [vmem:[%s2 + $0xf0] sm:$0xff]
    %v126 = vld [vmem:[%s2 + $0xf8] sm:$0xff]
    %v127 = vld [vmem:[%s3] sm:$0x1]
    %v129 = vperm.slane %v127, 0
    %131 = vmatpush.msra.mxu0 %v110
    %132 = vmatpush.msra.mxu0 %v109
    %133 = vmatpush.msra.mxu0 %v108
    %134 = vmatpush.msra.mxu0 %v107
    %135 = vmatpush.msra.mxu0 %v106
    %136 = vmatpush.msra.mxu0 %v105
    %137 = vmatpush.msra.mxu0 %v104
    %138 = vmatpush.msra.mxu0 %v103
    %139 = vmatpush.msra.mxu0 %v102
    %140 = vmatpush.msra.mxu0 %v101
    %141 = vmatpush.msra.mxu0 %v100
    %142 = vmatpush.msra.mxu0 %v99
    %143 = vmatpush.msra.mxu0 %v98
    %144 = vmatpush.msra.mxu0 %v97
    %145 = vmatpush.msra.mxu0 %v96
    %146 = vmatpush.msra.mxu0 %v95
    %147 = vmatmul.f32.gmra.mxu0 %v91
    %v148 = vpop.f32.mrf.mxu0
    %v149 = vadd.f32 %v129, %v148
    %150 = vmatmul.f32.gmra.mxu0 %v93
    %v151 = vpop.f32.mrf.mxu0
    %v152 = vadd.f32 %v129, %v151
    %153 = vdwg.mxu0
    %154 = vmatpush.msra.mxu0 %v126
    %155 = vmatpush.msra.mxu0 %v125
    %156 = vmatpush.msra.mxu0 %v124
    %157 = vmatpush.msra.mxu0 %v123
    %158 = vmatpush.msra.mxu0 %v122
    %159 = vmatpush.msra.mxu0 %v121
    %160 = vmatpush.msra.mxu0 %v120
    %161 = vmatpush.msra.mxu0 %v119
    %162 = vmatpush.msra.mxu0 %v118
    %163 = vmatpush.msra.mxu0 %v117
    %164 = vmatpush.msra.mxu0 %v116
    %165 = vmatpush.msra.mxu0 %v115
    %166 = vmatpush.msra.mxu0 %v114
    %167 = vmatpush.msra.mxu0 %v113
    %168 = vmatpush.msra.mxu0 %v112
    %169 = vmatpush.msra.mxu0 %v111
    %170 = vmatmul.f32.gmra.mxu0 %v92
    %v171 = vpop.f32.mrf.mxu0
    %v172 = vadd.f32 %v149, %v171
    %173 = vmatmul.f32.gmra.mxu0 %v94
    %v174 = vpop.f32.mrf.mxu0
    %v175 = vadd.f32 %v152, %v174
    %176 = vdwg.mxu0
    %v177 = vmax.f32 %v172, 0.0
    %v178 = vmax.f32 %v175, 0.0
    %v179 = vld [vmem:[%s4] sm:$0xff]
    %v180 = vld [vmem:[%s4 + $0x8] sm:$0xff]
    %v181 = vld [vmem:[%s4 + $0x10] sm:$0xff]
    %v182 = vld [vmem:[%s4 + $0x18] sm:$0xff]
    %v183 = vld [vmem:[%s4 + $0x20] sm:$0xff]
    %v184 = vld [vmem:[%s4 + $0x28] sm:$0xff]
    %v185 = vld [vmem:[%s4 + $0x30] sm:$0xff]
    %v186 = vld [vmem:[%s4 + $0x38] sm:$0xff]
    %v187 = vld [vmem:[%s4 + $0x40] sm:$0xff]
    %v188 = vld [vmem:[%s4 + $0x48] sm:$0xff]
    %v189 = vld [vmem:[%s4 + $0x50] sm:$0xff]
    %v190 = vld [vmem:[%s4 + $0x58] sm:$0xff]
    %v191 = vld [vmem:[%s4 + $0x60] sm:$0xff]
    %v192 = vld [vmem:[%s4 + $0x68] sm:$0xff]
    %v193 = vld [vmem:[%s4 + $0x70] sm:$0xff]
    %v194 = vld [vmem:[%s4 + $0x78] sm:$0xff]
    %v195 = vld [vmem:[%s5] sm:$0x1]
    %v197 = vperm.slane %v195, 0
    %199 = vmatpush.msra.mxu0 %v194
    %200 = vmatpush.msra.mxu0 %v193
    %201 = vmatpush.msra.mxu0 %v192
    %202 = vmatpush.msra.mxu0 %v191
    %203 = vmatpush.msra.mxu0 %v190
    %204 = vmatpush.msra.mxu0 %v189
    %205 = vmatpush.msra.mxu0 %v188
    %206 = vmatpush.msra.mxu0 %v187
    %207 = vmatpush.msra.mxu0 %v186
    %208 = vmatpush.msra.mxu0 %v185
    %209 = vmatpush.msra.mxu0 %v184
    %210 = vmatpush.msra.mxu0 %v183
    %211 = vmatpush.msra.mxu0 %v182
    %212 = vmatpush.msra.mxu0 %v181
    %213 = vmatpush.msra.mxu0 %v180
    %214 = vmatpush.msra.mxu0 %v179
    %215 = vmatmul.f32.gmra.mxu0 %v177
    %v216 = vpop.f32.mrf.mxu0
    %v217 = vadd.f32 %v197, %v216
    %218 = vmatmul.f32.gmra.mxu0 %v178
    %v219 = vpop.f32.mrf.mxu0
    %v220 = vadd.f32 %v197, %v219
    %221 = vdwg.mxu0
    %v222 = vld [vmem:[%s6] sm:$0xff]
    %v223 = vld [vmem:[%s6 + $0x8] sm:$0xff]
    %v224 = vld [vmem:[%s6 + $0x10] sm:$0xff]
    %v225 = vld [vmem:[%s6 + $0x18] sm:$0xff]
    %v226 = vld [vmem:[%s6 + $0x20] sm:$0xff]
    %v227 = vld [vmem:[%s6 + $0x28] sm:$0xff]
    %v228 = vld [vmem:[%s6 + $0x30] sm:$0xff]
    %v229 = vld [vmem:[%s6 + $0x38] sm:$0xff]
    %v230 = vld [vmem:[%s6 + $0x40] sm:$0xff]
    %v231 = vld [vmem:[%s6 + $0x48] sm:$0xff]
    %v232 = vld [vmem:[%s6 + $0x50] sm:$0xff]
    %v233 = vld [vmem:[%s6 + $0x58] sm:$0xff]
    %v234 = vld [vmem:[%s6 + $0x60] sm:$0xff]
    %v235 = vld [vmem:[%s6 + $0x68] sm:$0xff]
    %v236 = vld [vmem:[%s6 + $0x70] sm:$0xff]
    %v237 = vld [vmem:[%s6 + $0x78] sm:$0xff]
    %v238 = vld [vmem:[%s7] sm:$0x1]
    %v240 = vperm.slane %v238, 0
    %242 = vmatpush.msra.mxu0 %v237
    %243 = vmatpush.msra.mxu0 %v236
    %244 = vmatpush.msra.mxu0 %v235
    %245 = vmatpush.msra.mxu0 %v234
    %246 = vmatpush.msra.mxu0 %v233
    %247 = vmatpush.msra.mxu0 %v232
    %248 = vmatpush.msra.mxu0 %v231
    %249 = vmatpush.msra.mxu0 %v230
    %250 = vmatpush.msra.mxu0 %v229
    %251 = vmatpush.msra.mxu0 %v228
    %252 = vmatpush.msra.mxu0 %v227
    %253 = vmatpush.msra.mxu0 %v226
    %254 = vmatpush.msra.mxu0 %v225
    %255 = vmatpush.msra.mxu0 %v224
    %256 = vmatpush.msra.mxu0 %v223
    %257 = vmatpush.msra.mxu0 %v222
    %258 = vmatmul.f32.gmra.mxu0 %v177
    %v259 = vpop.f32.mrf.mxu0
    %v260 = vadd.f32 %v240, %v259
    %261 = vmatmul.f32.gmra.mxu0 %v178
    %v262 = vpop.f32.mrf.mxu0
    %v263 = vadd.f32 %v240, %v262
    %264 = vdwg.mxu0
    %267 = vrot.lane.b32.xlu0 %v260, 64
    %v268 = vpop.permute.xlu0 %267
    %269 = vrot.lane.b32.xlu0 %v263, 64
    %v270 = vpop.permute.xlu0 %269
    %vm273 = vcmask 523264
    %v274 = vsel %vm273, %v217, %v268
    %v275 = vsel %vm273, %v220, %v270
    %276 = vst [vmem:[%s13] sm:$0xff] %v274
    %277 = vst [vmem:[%s13 + $0x8] sm:$0xff] %v275
    %v278 = vld [vmem:[#allocation5] sm:$0xff]
    %v279 = vld [vmem:[#allocation5 + $0x8] sm:$0xff]
    %v280 = vmul.f32 %v260, 0.5
    %v281 = vmul.f32 %v263, 0.5
    %v282 = vmul.f32 %v280, 1.442695
    %v283 = vpow.pop %v282
    %v284 = vmul.f32 %v281, 1.442695
    %v285 = vpow.pop %v284
    %v286 = vmul.f32 %v278, %v283
    %v287 = vmul.f32 %v279, %v285
    %v288 = vadd.f32 %v217, %v286
    %v289 = vadd.f32 %v220, %v287
    %v290 = vld [vmem:[#allocation7] sm:$0xff]
    %v291 = vld [vmem:[#allocation7 + $0x8] sm:$0xff]
    %v292 = vld [vmem:[#allocation7 + $0x10] sm:$0xff]
    %v293 = vld [vmem:[#allocation7 + $0x18] sm:$0xff]
    %v294 = vld [vmem:[#allocation7 + $0x20] sm:$0xff]
    %v295 = vld [vmem:[#allocation7 + $0x28] sm:$0xff]
    %v296 = vld [vmem:[#allocation7 + $0x30] sm:$0xff]
    %v297 = vld [vmem:[#allocation7 + $0x38] sm:$0xff]
    %v298 = vld [vmem:[%s9] sm:$0x1]
    %v300 = vperm.slane %v298, 0
    %v303 = vsel %vm273, %v288, 0
    %v306 = vsel %vm273, %v289, 0
    %308 = vmatpush.msra.mxu0 0.0
    %309 = vmatpush.msra.mxu0 0.0
    %310 = vmatpush.msra.mxu0 0.0
    %311 = vmatpush.msra.mxu0 0.0
    %312 = vmatpush.msra.mxu0 0.0
    %313 = vmatpush.msra.mxu0 0.0
    %314 = vmatpush.msra.mxu0 0.0
    %315 = vmatpush.msra.mxu0 0.0
    %316 = vmatpush.msra.mxu0 %v297
    %317 = vmatpush.msra.mxu0 %v296
    %318 = vmatpush.msra.mxu0 %v295
    %319 = vmatpush.msra.mxu0 %v294
    %320 = vmatpush.msra.mxu0 %v293
    %321 = vmatpush.msra.mxu0 %v292
    %322 = vmatpush.msra.mxu0 %v291
    %323 = vmatpush.msra.mxu0 %v290
    %324 = vmatmul.f32.gmra.mxu0 %v303
    %v325 = vpop.f32.mrf.mxu0
    %v326 = vadd.f32 %v300, %v325
    %327 = vmatmul.f32.gmra.mxu0 %v306
    %v328 = vpop.f32.mrf.mxu0
    %v329 = vadd.f32 %v300, %v328
    %330 = vdwg.mxu0
    %v331 = vmax.f32 %v326, 0.0
    %v332 = vmax.f32 %v329, 0.0
    %v333 = vld [vmem:[%s10] sm:$0xff]
    %v334 = vld [vmem:[%s10 + $0x8] sm:$0xff]
    %v335 = vld [vmem:[%s10 + $0x10] sm:$0xff]
    %v336 = vld [vmem:[%s10 + $0x18] sm:$0xff]
    %v337 = vld [vmem:[%s10 + $0x20] sm:$0xff]
    %v338 = vld [vmem:[%s10 + $0x28] sm:$0xff]
    %v339 = vld [vmem:[%s10 + $0x30] sm:$0xff]
    %v340 = vld [vmem:[%s10 + $0x38] sm:$0xff]
    %v341 = vld [vmem:[%s10 + $0x40] sm:$0xff]
    %v342 = vld [vmem:[%s10 + $0x48] sm:$0xff]
    %v343 = vld [vmem:[%s10 + $0x50] sm:$0xff]
    %v344 = vld [vmem:[%s10 + $0x58] sm:$0xff]
    %v345 = vld [vmem:[%s10 + $0x60] sm:$0xff]
    %v346 = vld [vmem:[%s10 + $0x68] sm:$0xff]
    %v347 = vld [vmem:[%s10 + $0x70] sm:$0xff]
    %v348 = vld [vmem:[%s10 + $0x78] sm:$0xff]
    %v349 = vld [vmem:[%s10 + $0x80] sm:$0xff]
    %v350 = vld [vmem:[%s10 + $0x88] sm:$0xff]
    %v351 = vld [vmem:[%s10 + $0x90] sm:$0xff]
    %v352 = vld [vmem:[%s10 + $0x98] sm:$0xff]
    %v353 = vld [vmem:[%s10 + $0xa0] sm:$0xff]
    %v354 = vld [vmem:[%s10 + $0xa8] sm:$0xff]
    %v355 = vld [vmem:[%s10 + $0xb0] sm:$0xff]
    %v356 = vld [vmem:[%s10 + $0xb8] sm:$0xff]
    %v357 = vld [vmem:[%s10 + $0xc0] sm:$0xff]
    %v358 = vld [vmem:[%s10 + $0xc8] sm:$0xff]
    %v359 = vld [vmem:[%s10 + $0xd0] sm:$0xff]
    %v360 = vld [vmem:[%s10 + $0xd8] sm:$0xff]
    %v361 = vld [vmem:[%s10 + $0xe0] sm:$0xff]
    %v362 = vld [vmem:[%s10 + $0xe8] sm:$0xff]
    %v363 = vld [vmem:[%s10 + $0xf0] sm:$0xff]
    %v364 = vld [vmem:[%s10 + $0xf8] sm:$0xff]
    %v365 = vld [vmem:[%s11] sm:$0x3]
    %v367 = vperm.slane %v365, 0
    %v368 = vperm.slane %v365, 1
    %371 = vmatpush.msra.mxu0 %v363
    %372 = vmatpush.msra.mxu0 %v361
    %373 = vmatpush.msra.mxu0 %v359
    %374 = vmatpush.msra.mxu0 %v357
    %375 = vmatpush.msra.mxu0 %v355
    %376 = vmatpush.msra.mxu0 %v353
    %377 = vmatpush.msra.mxu0 %v351
    %378 = vmatpush.msra.mxu0 %v349
    %379 = vmatpush.msra.mxu0 %v347
    %380 = vmatpush.msra.mxu0 %v345
    %381 = vmatpush.msra.mxu0 %v343
    %382 = vmatpush.msra.mxu0 %v341
    %383 = vmatpush.msra.mxu0 %v339
    %384 = vmatpush.msra.mxu0 %v337
    %385 = vmatpush.msra.mxu0 %v335
    %386 = vmatpush.msra.mxu0 %v333
    %387 = vmatmul.f32.gmra.mxu0 %v331
    %v388 = vpop.f32.mrf.mxu0
    %v389 = vadd.f32 %v367, %v388
    %390 = vmatmul.f32.gmra.mxu0 %v332
    %v391 = vpop.f32.mrf.mxu0
    %v392 = vadd.f32 %v367, %v391
    %393 = vdwg.mxu0
    %394 = vmatpush.msra.mxu0 %v364
    %395 = vmatpush.msra.mxu0 %v362
    %396 = vmatpush.msra.mxu0 %v360
    %397 = vmatpush.msra.mxu0 %v358
    %398 = vmatpush.msra.mxu0 %v356
    %399 = vmatpush.msra.mxu0 %v354
    %400 = vmatpush.msra.mxu0 %v352
    %401 = vmatpush.msra.mxu0 %v350
    %402 = vmatpush.msra.mxu0 %v348
    %403 = vmatpush.msra.mxu0 %v346
    %404 = vmatpush.msra.mxu0 %v344
    %405 = vmatpush.msra.mxu0 %v342
    %406 = vmatpush.msra.mxu0 %v340
    %407 = vmatpush.msra.mxu0 %v338
    %408 = vmatpush.msra.mxu0 %v336
    %409 = vmatpush.msra.mxu0 %v334
    %410 = vmatmul.f32.gmra.mxu0 %v331
    %v411 = vpop.f32.mrf.mxu0
    %v412 = vadd.f32 %v368, %v411
    %413 = vmatmul.f32.gmra.mxu0 %v332
    %v414 = vpop.f32.mrf.mxu0
    %v415 = vadd.f32 %v368, %v414
    %416 = vdwg.mxu0
    %v417 = vxor.u32 %v389, 2147483648
    %v418 = vxor.u32 %v412, 2147483648
    %v419 = vxor.u32 %v392, 2147483648
    %v420 = vxor.u32 %v415, 2147483648
    %v421 = vmul.f32 %v417, 1.442695
    %v422 = vpow.pop %v421
    %v423 = vmul.f32 %v418, 1.442695
    %v424 = vpow.pop %v423
    %v425 = vmul.f32 %v419, 1.442695
    %v426 = vpow.pop %v425
    %v427 = vmul.f32 %v420, 1.442695
    %v428 = vpow.pop %v427
    %v429 = vadd.f32 %v422, 1.0
    %v430 = vadd.f32 %v424, 1.0
    %v431 = vadd.f32 %v426, 1.0
    %v432 = vadd.f32 %v428, 1.0
    %v433 = vrcp.pop %v429
    %v434 = vmul.f32 %v429, %v433
    %v435 = vsub.f32 1.0, %v434
    %v436 = vmul.f32 %v433, %v435
    %v437 = vadd.f32 %v433, %v436
    %vm438 = vweird.f32 %v429
    %vm439 = vweird.f32 %v433
    %vm440 = vmor %vm438, %vm439
    %v441 = vsel %vm440, %v433, %v437
    %v442 = vand.u32 2147483647, %v429
    %vm443 = vcmp.eq.f32.partialorder %v442, 8.507059e+37
    %v444 = vand.u32 %v429, 2147483648
    %v445 = vor.u32 1.1754944e-38, %v444
    %v446 = vsel %vm443, %v445, %v441
    %v447 = vmul.f32 1.0, %v446
    %v448 = vrcp.pop %v430
    %v449 = vmul.f32 %v430, %v448
    %v450 = vsub.f32 1.0, %v449
    %v451 = vmul.f32 %v448, %v450
    %v452 = vadd.f32 %v448, %v451
    %vm453 = vweird.f32 %v430
    %vm454 = vweird.f32 %v448
    %vm455 = vmor %vm453, %vm454
    %v456 = vsel %vm455, %v448, %v452
    %v457 = vand.u32 2147483647, %v430
    %vm458 = vcmp.eq.f32.partialorder %v457, 8.507059e+37
    %v459 = vand.u32 %v430, 2147483648
    %v460 = vor.u32 1.1754944e-38, %v459
    %v461 = vsel %vm458, %v460, %v456
    %v462 = vmul.f32 1.0, %v461
    %v463 = vrcp.pop %v431
    %v464 = vmul.f32 %v431, %v463
    %v465 = vsub.f32 1.0, %v464
    %v466 = vmul.f32 %v463, %v465
    %v467 = vadd.f32 %v463, %v466
    %vm468 = vweird.f32 %v431
    %vm469 = vweird.f32 %v463
    %vm470 = vmor %vm468, %vm469
    %v471 = vsel %vm470, %v463, %v467
    %v472 = vand.u32 2147483647, %v431
    %vm473 = vcmp.eq.f32.partialorder %v472, 8.507059e+37
    %v474 = vand.u32 %v431, 2147483648
    %v475 = vor.u32 1.1754944e-38, %v474
    %v476 = vsel %vm473, %v475, %v471
    %v477 = vmul.f32 1.0, %v476
    %v478 = vrcp.pop %v432
    %v479 = vmul.f32 %v432, %v478
    %v480 = vsub.f32 1.0, %v479
    %v481 = vmul.f32 %v478, %v480
    %v482 = vadd.f32 %v478, %v481
    %vm483 = vweird.f32 %v432
    %vm484 = vweird.f32 %v478
    %vm485 = vmor %vm483, %vm484
    %v486 = vsel %vm485, %v478, %v482
    %v487 = vand.u32 2147483647, %v432
    %vm488 = vcmp.eq.f32.partialorder %v487, 8.507059e+37
    %v489 = vand.u32 %v432, 2147483648
    %v490 = vor.u32 1.1754944e-38, %v489
    %v491 = vsel %vm488, %v490, %v486
    %v492 = vmul.f32 1.0, %v491
    %493 = vst [vmem:[#allocation8] sm:$0xff] %v447
    %494 = vst [vmem:[#allocation8 + $0x8] sm:$0xff] %v462
    %495 = vst [vmem:[#allocation8 + $0x10] sm:$0xff] %v477
    %496 = vst [vmem:[#allocation8 + $0x18] sm:$0xff] %v492
    // Predicated region
    $region62: #{scgen_vae_forward.1} parent=1 // pred_check
      _
    $region63: #{scgen_vae_forward.1} parent=1 // pred_check_branch
      %498 = sbr.rel (0) target = $region65
    $region64: #{scgen_vae_forward.1} parent=1 // pred_region
      %500 = vsyncadd [#allocation4], 0
      %s501 = sshll.u32 [#allocation8], 4
      %s502 = int_to_ptr.vmem [resolvable:$true] %s501
      %s503 = sshll.u32 %s12, 4
      %s504 = int_to_ptr.hbm [resolvable:$true] %s503
      %509 = dma.vmem_to_hbm [thread:$0]  %s502, 512, %s504, [#allocation4], 256, 256, 16
    $region65: #{scgen_vae_forward.1} parent=1 // pred_fallthru
      _
    // Predicated region
    $region66: #{scgen_vae_forward.1} parent=1 // pred_check
      _
    $region67: #{scgen_vae_forward.1} parent=1 // pred_check_branch
      %511 = sbr.rel (0) target = $region69
    $region68: #{scgen_vae_forward.1} parent=1 // pred_region
      _
    $region69: #{scgen_vae_forward.1} parent=1 // pred_fallthru
      _
    // Predicated region
    $region70: #{scgen_vae_forward.1} parent=1 // pred_check
      _
    $region71: #{scgen_vae_forward.1} parent=1 // pred_check_branch
      %513 = sbr.rel (0) target = $region73
    $region72: #{scgen_vae_forward.1} parent=1 // pred_region
      %515 = dma.done [#allocation4], 512
    $region73: #{scgen_vae_forward.1} parent=1 // pred_fallthru
      _
    // Predicated region
    $region74: #{scgen_vae_forward.1} parent=1 // pred_check
      _
    $region75: #{scgen_vae_forward.1} parent=1 // pred_check_branch
      %517 = sbr.rel (0) target = $region77
    $region76: #{scgen_vae_forward.1} parent=1 // pred_region
      _
    $region77: #{scgen_vae_forward.1} parent=1 // pred_fallthru
      _
    %518 = vsyncpa [#allocation3], 1
    %519 = vsyncpa [#allocation6], 1
    %520 = vsyncpa [#allocation4], 1

</llo_original>
